<compile_context>
chip_gen: v7x
topology: tpu7x:2x2x1
jax: 0.10.0
libtpu: 0.0.40
codegen_flags: <defaults>
</compile_context>

<pallas_src>
import jax
import jax.numpy as jnp
from jax import lax
from jax.experimental import pallas as pl
from jax.experimental.pallas import tpu as pltpu

EPS = 1e-5  # nn.LayerNorm default


def _layernorm_cols(h, gamma, beta):
    # LayerNorm over the feature axis (axis 0) of an (F, batch) tile.
    # Biased variance + eps inside the sqrt => identical to PyTorch semantics.
    mu = jnp.mean(h, axis=0, keepdims=True)                  # (1, bt)
    var = jnp.mean((h - mu) ** 2, axis=0, keepdims=True)     # (1, bt)
    return (h - mu) * lax.rsqrt(var + EPS) * gamma + beta    # gamma/beta: (F, 1)


def actor_mlp_kernel(
    x_ref,                                   # (D_in, bt)   batch on lanes
    w1_ref, b1_ref, g1_ref, be1_ref,          # (H1,D_in), (H1,1)x3
    w2_ref, b2_ref, g2_ref, be2_ref,          # (H2,H1),  (H2,1)x3
    w3_ref, b3_ref,                           # (Do,H2),  (Do,1)
    o_ref,                                    # (Do, bt)
):
    # Hoist parameter reads once per grid step.
    w1 = w1_ref[...]
    w2 = w2_ref[...]
    w3 = w3_ref[...]
    b1 = b1_ref[...].astype(jnp.float32)
    g1 = g1_ref[...].astype(jnp.float32)
    be1 = be1_ref[...].astype(jnp.float32)
    b2 = b2_ref[...].astype(jnp.float32)
    g2 = g2_ref[...].astype(jnp.float32)
    be2 = be2_ref[...].astype(jnp.float32)
    b3 = b3_ref[...].astype(jnp.float32)

    x = x_ref[...]                                           # (D_in, bt)

    # Layer 1: Linear -> ReLU -> LayerNorm   (all activations are (F, bt), lane-dense)
    h = jnp.dot(w1, x, preferred_element_type=jnp.float32) + b1      # (H1, bt)
    h = jnp.maximum(h, 0.0)
    h = _layernorm_cols(h, g1, be1)

    # Layer 2: Linear -> ReLU -> LayerNorm
    h = jnp.dot(w2, h.astype(w2.dtype), preferred_element_type=jnp.float32) + b2   # (H2, bt)
    h = jnp.maximum(h, 0.0)
    h = _layernorm_cols(h, g2, be2)

    # Output head: Linear
    o = jnp.dot(w3, h.astype(w3.dtype), preferred_element_type=jnp.float32) + b3   # (Do, bt)
    o_ref[...] = o.astype(o_ref.dtype)


def _default_batch_tile(B):
    """Batch tile on the LANE axis (always a multiple of 128).

    - Aim for >= 2 grid steps once B > 128 so v7x's two TensorCores both get work
      (the extra ~0.35us step is negligible on single-TC v5e/v6e).
    - Cap at 2048 rows: per-tile VMEM stays well under 1 MiB double-buffered, far
      below even v7x's 64 MiB, and fewer steps amortize per-step overhead at large B.
    """
    half = (B + 1) // 2
    bt = ((half + 127) // 128) * 128
    return int(min(2048, max(128, bt)))


def actor_network_forward(x, params, *, batch_tile=None, compute_dtype=jnp.float32):
    """Fused MLP forward.

    x: (B, input_dim).  params are in PyTorch layout: weights (out, in), 1-D biases /
    LayerNorm affine.  compute_dtype=bf16 halves x / weight DMA bytes and is safe on
    all generations (LayerNorm & accumulation stay f32).
    """
    (w1, b1, g1, be1, w2, b2, g2, be2, w3, b3) = params
    B, D_in = x.shape
    H1 = w1.shape[0]
    H2 = w2.shape[0]
    D_out = w3.shape[0]

    bt = _default_batch_tile(B) if batch_tile is None else int(batch_tile)
    bt = max(128, ((bt + 127) // 128) * 128)          # lane granule
    grid = (pl.cdiv(B, bt),)                          # ragged B: partial last block is masked

    # Transpose once in the wrapper (layout plumbing, cast first so bf16 moves half
    # the bytes).  All in-kernel tiles are then lane-dense in the batch dimension.
    x_t = x.astype(compute_dtype).T                   # (D_in, B)

    def col(v):                                       # 1-D param -> (F, 1) column
        return v.reshape(-1, 1).astype(jnp.float32)

    def rep(shape):                                   # small params replicated across grid
        return pl.BlockSpec(shape, lambda i: (0, 0))

    out_t = pl.pallas_call(
        actor_mlp_kernel,
        out_shape=jax.ShapeDtypeStruct((D_out, B), jnp.float32),
        grid_spec=pltpu.PrefetchScalarGridSpec(
            num_scalar_prefetch=0,
            grid=grid,
            in_specs=[
                pl.BlockSpec((D_in, bt), lambda i: (0, i)),   # x^T tile (batch on lanes)
                rep((H1, D_in)), rep((H1, 1)), rep((H1, 1)), rep((H1, 1)),
                rep((H2, H1)), rep((H2, 1)), rep((H2, 1)), rep((H2, 1)),
                rep((D_out, H2)), rep((D_out, 1)),
            ],
            out_specs=pl.BlockSpec((D_out, bt), lambda i: (0, i)),
        ),
        compiler_params=pltpu.CompilerParams(
            dimension_semantics=("parallel",),        # batch axis shardable across v7x's 2 TCs
        ),
    )(
        x_t,
        w1.astype(compute_dtype), col(b1), col(g1), col(be1),
        w2.astype(compute_dtype), col(b2), col(g2), col(be2),
        w3.astype(compute_dtype), col(b3),
    )

    return out_t.T                                    # (B, D_out)


def init_params(key, input_dim, output_dim, hidden_sizes=(64, 32)):
    """Deterministic synthetic parameters in PyTorch nn.Linear layout (out, in)."""
    h1, h2 = hidden_sizes
    ks = jax.random.split(key, 6)

    def linear(kw, kb, fan_in, fan_out):
        bound = 1.0 / jnp.sqrt(fan_in)
        w = jax.random.uniform(kw, (fan_out, fan_in), jnp.float32, -bound, bound)
        b = jax.random.uniform(kb, (fan_out,), jnp.float32, -bound, bound)
        return w, b

    w1, b1 = linear(ks[0], ks[1], input_dim, h1)
    w2, b2 = linear(ks[2], ks[3], h1, h2)
    w3, b3 = linear(ks[4], ks[5], h2, output_dim)
    # LayerNorm affine params (PyTorch defaults: gamma=1, beta=0)
    g1, be1 = jnp.ones((h1,), jnp.float32), jnp.zeros((h1,), jnp.float32)
    g2, be2 = jnp.ones((h2,), jnp.float32), jnp.zeros((h2,), jnp.float32)
    return (w1, b1, g1, be1, w2, b2, g2, be2, w3, b3)


def actor_network_ref(x, params):
    """Pure-JAX f32 reference (PyTorch semantics) for correctness checking."""
    (w1, b1, g1, be1, w2, b2, g2, be2, w3, b3) = params

    def ln(h, g, b):
        mu = jnp.mean(h, axis=-1, keepdims=True)
        var = jnp.mean((h - mu) ** 2, axis=-1, keepdims=True)
        return (h - mu) / jnp.sqrt(var + EPS) * g + b

    h = jnp.maximum(x @ w1.T + b1, 0.0)
    h = ln(h, g1, be1)
    h = jnp.maximum(h @ w2.T + b2, 0.0)
    h = ln(h, g2, be2)
    return h @ w3.T + b3


if __name__ == "__main__":
    key = jax.random.PRNGKey(0)
    k_x, k_x2, k_x3, k_p = jax.random.split(key, 4)

    input_dim = 16
    output_dim = 8
    hidden_sizes = (64, 32)
    params = init_params(k_p, input_dim, output_dim, hidden_sizes)

    # 1) f32 path, small batch (single grid step, partial 128-lane block).
    batch = 64
    x = jax.random.normal(k_x, (batch, input_dim), jnp.float32)
    out = jax.block_until_ready(actor_network_forward(x, params))
    ref = actor_network_ref(x, params)
    assert out.shape == (batch, output_dim)
    assert jnp.allclose(out, ref, atol=1e-4, rtol=1e-4), "f32 Pallas output mismatch vs reference"

    # 2) Ragged tiny batch (B=10 < lane tile) exercises the masked partial-block path.
    batch_r = 10
    x_r = jax.random.normal(k_x2, (batch_r, input_dim), jnp.float32)
    out_r = jax.block_until_ready(actor_network_forward(x_r, params))
    ref_r = actor_network_ref(x_r, params)
    assert out_r.shape == (batch_r, output_dim)
    assert jnp.allclose(out_r, ref_r, atol=1e-4, rtol=1e-4), "ragged-batch output mismatch"

    # 3) Multi-step grid (2 parallel steps, last one partial) + bf16 matmul operands.
    batch_m = 200
    x_m = jax.random.normal(k_x3, (batch_m, input_dim), jnp.float32)
    out_m = jax.block_until_ready(actor_network_forward(x_m, params, batch_tile=128))
    ref_m = actor_network_ref(x_m, params)
    assert out_m.shape == (batch_m, output_dim)
    assert jnp.allclose(out_m, ref_m, atol=1e-4, rtol=1e-4), "multi-step grid output mismatch"

    out_bf16 = jax.block_until_ready(
        actor_network_forward(x, params, compute_dtype=jnp.bfloat16)
    )
    assert out_bf16.shape == (batch, output_dim)
    assert jnp.allclose(out_bf16, ref, atol=1e-1, rtol=1e-1), "bf16 output diverged from reference"

    print("KERNEL_OK")
</pallas_src>

<mosaic_0001>
module attributes {stable_mosaic.version = 11 : i64} {
  func.func @actor_mlp_kernel(%arg0: i32, %arg1: memref<16x128xf32, #tpu.memory_space<vmem>>, %arg2: memref<64x16xf32, #tpu.memory_space<vmem>>, %arg3: memref<64x1xf32, #tpu.memory_space<vmem>>, %arg4: memref<64x1xf32, #tpu.memory_space<vmem>>, %arg5: memref<64x1xf32, #tpu.memory_space<vmem>>, %arg6: memref<32x64xf32, #tpu.memory_space<vmem>>, %arg7: memref<32x1xf32, #tpu.memory_space<vmem>>, %arg8: memref<32x1xf32, #tpu.memory_space<vmem>>, %arg9: memref<32x1xf32, #tpu.memory_space<vmem>>, %arg10: memref<8x32xf32, #tpu.memory_space<vmem>>, %arg11: memref<8x1xf32, #tpu.memory_space<vmem>>, %arg12: memref<8x128xf32, #tpu.memory_space<vmem>>) attributes {dimension_semantics = [#tpu.dimension_semantics<parallel>], iteration_bounds = array<i64: 1>, scalar_prefetch = 0 : i64, scratch_operands = 0 : i64, tpu.core_type = #tpu.core_type<tc>, window_params = [{transform_indices = @transform_0, window_bounds = array<i64: 16, 128>}, {pipeline_mode = #tpu.pipeline_mode<synchronous>, transform_indices = @transform_1, window_bounds = array<i64: 64, 16>}, {pipeline_mode = #tpu.pipeline_mode<synchronous>, transform_indices = @transform_2, window_bounds = array<i64: 64, 1>}, {pipeline_mode = #tpu.pipeline_mode<synchronous>, transform_indices = @transform_3, window_bounds = array<i64: 64, 1>}, {pipeline_mode = #tpu.pipeline_mode<synchronous>, transform_indices = @transform_4, window_bounds = array<i64: 64, 1>}, {pipeline_mode = #tpu.pipeline_mode<synchronous>, transform_indices = @transform_5, window_bounds = array<i64: 32, 64>}, {pipeline_mode = #tpu.pipeline_mode<synchronous>, transform_indices = @transform_6, window_bounds = array<i64: 32, 1>}, {pipeline_mode = #tpu.pipeline_mode<synchronous>, transform_indices = @transform_7, window_bounds = array<i64: 32, 1>}, {pipeline_mode = #tpu.pipeline_mode<synchronous>, transform_indices = @transform_8, window_bounds = array<i64: 32, 1>}, {pipeline_mode = #tpu.pipeline_mode<synchronous>, transform_indices = @transform_9, window_bounds = array<i64: 8, 32>}, {pipeline_mode = #tpu.pipeline_mode<synchronous>, transform_indices = @transform_10, window_bounds = array<i64: 8, 1>}, {transform_indices = @transform_11, window_bounds = array<i64: 8, 128>}]} {
    %c0 = arith.constant 0 : index
    %c0_0 = arith.constant 0 : index
    %0 = vector.load %arg2[%c0, %c0_0] : memref<64x16xf32, #tpu.memory_space<vmem>>, vector<64x16xf32>
    %c0_1 = arith.constant 0 : index
    %c0_2 = arith.constant 0 : index
    %1 = vector.load %arg6[%c0_1, %c0_2] : memref<32x64xf32, #tpu.memory_space<vmem>>, vector<32x64xf32>
    %c0_3 = arith.constant 0 : index
    %c0_4 = arith.constant 0 : index
    %2 = vector.load %arg10[%c0_3, %c0_4] : memref<8x32xf32, #tpu.memory_space<vmem>>, vector<8x32xf32>
    %c0_5 = arith.constant 0 : index
    %c0_6 = arith.constant 0 : index
    %3 = vector.load %arg3[%c0_5, %c0_6] : memref<64x1xf32, #tpu.memory_space<vmem>>, vector<64x1xf32>
    %c0_7 = arith.constant 0 : index
    %c0_8 = arith.constant 0 : index
    %4 = vector.load %arg4[%c0_7, %c0_8] : memref<64x1xf32, #tpu.memory_space<vmem>>, vector<64x1xf32>
    %c0_9 = arith.constant 0 : index
    %c0_10 = arith.constant 0 : index
    %5 = vector.load %arg5[%c0_9, %c0_10] : memref<64x1xf32, #tpu.memory_space<vmem>>, vector<64x1xf32>
    %c0_11 = arith.constant 0 : index
    %c0_12 = arith.constant 0 : index
    %6 = vector.load %arg7[%c0_11, %c0_12] : memref<32x1xf32, #tpu.memory_space<vmem>>, vector<32x1xf32>
    %c0_13 = arith.constant 0 : index
    %c0_14 = arith.constant 0 : index
    %7 = vector.load %arg8[%c0_13, %c0_14] : memref<32x1xf32, #tpu.memory_space<vmem>>, vector<32x1xf32>
    %c0_15 = arith.constant 0 : index
    %c0_16 = arith.constant 0 : index
    %8 = vector.load %arg9[%c0_15, %c0_16] : memref<32x1xf32, #tpu.memory_space<vmem>>, vector<32x1xf32>
    %c0_17 = arith.constant 0 : index
    %c0_18 = arith.constant 0 : index
    %9 = vector.load %arg11[%c0_17, %c0_18] : memref<8x1xf32, #tpu.memory_space<vmem>>, vector<8x1xf32>
    %c0_19 = arith.constant 0 : index
    %c0_20 = arith.constant 0 : index
    %10 = vector.load %arg1[%c0_19, %c0_20] : memref<16x128xf32, #tpu.memory_space<vmem>>, vector<16x128xf32>
    %cst = arith.constant dense<0.000000e+00> : vector<64x128xf32>
    %11 = tpu.matmul %0, %10, %cst {dimension_numbers = #tpu.dot_dimension_numbers<[1], [0], [0], [1], [0, 0, 1, 1], [], []>} : vector<64x16xf32>, vector<16x128xf32>, vector<64x128xf32> -> vector<64x128xf32>
    %12 = vector.broadcast %3 : vector<64x1xf32> to vector<64x128xf32>
    %13 = arith.addf %11, %12 : vector<64x128xf32>
    %cst_21 = arith.constant 0.000000e+00 : f32
    %14 = vector.broadcast %cst_21 : f32 to vector<64x128xf32>
    %15 = arith.maximumf %13, %14 : vector<64x128xf32>
    %cst_22 = arith.constant dense<0.000000e+00> : vector<128xf32>
    %16 = vector.multi_reduction <add>, %15, %cst_22 [0] : vector<64x128xf32> to vector<128xf32>
    %17 = vector.shape_cast %16 : vector<128xf32> to vector<1x128xf32>
    %cst_23 = arith.constant 6.400000e+01 : f32
    %18 = vector.broadcast %cst_23 : f32 to vector<1x128xf32>
    %19 = arith.divf %17, %18 : vector<1x128xf32>
    %20 = vector.broadcast %19 : vector<1x128xf32> to vector<64x128xf32>
    %21 = arith.subf %15, %20 : vector<64x128xf32>
    %22 = arith.mulf %21, %21 : vector<64x128xf32>
    %cst_24 = arith.constant dense<0.000000e+00> : vector<128xf32>
    %23 = vector.multi_reduction <add>, %22, %cst_24 [0] : vector<64x128xf32> to vector<128xf32>
    %24 = vector.shape_cast %23 : vector<128xf32> to vector<1x128xf32>
    %cst_25 = arith.constant 6.400000e+01 : f32
    %25 = vector.broadcast %cst_25 : f32 to vector<1x128xf32>
    %26 = arith.divf %24, %25 : vector<1x128xf32>
    %27 = vector.broadcast %19 : vector<1x128xf32> to vector<64x128xf32>
    %28 = arith.subf %15, %27 : vector<64x128xf32>
    %cst_26 = arith.constant 9.99999974E-6 : f32
    %29 = vector.broadcast %cst_26 : f32 to vector<1x128xf32>
    %30 = arith.addf %26, %29 : vector<1x128xf32>
    %31 = math.rsqrt %30 : vector<1x128xf32>
    %32 = vector.broadcast %31 : vector<1x128xf32> to vector<64x128xf32>
    %33 = arith.mulf %28, %32 : vector<64x128xf32>
    %34 = vector.broadcast %4 : vector<64x1xf32> to vector<64x128xf32>
    %35 = arith.mulf %33, %34 : vector<64x128xf32>
    %36 = vector.broadcast %5 : vector<64x1xf32> to vector<64x128xf32>
    %37 = arith.addf %35, %36 : vector<64x128xf32>
    %cst_27 = arith.constant dense<0.000000e+00> : vector<32x128xf32>
    %38 = tpu.matmul %1, %37, %cst_27 {dimension_numbers = #tpu.dot_dimension_numbers<[1], [0], [0], [1], [0, 0, 1, 1], [], []>} : vector<32x64xf32>, vector<64x128xf32>, vector<32x128xf32> -> vector<32x128xf32>
    %39 = vector.broadcast %6 : vector<32x1xf32> to vector<32x128xf32>
    %40 = arith.addf %38, %39 : vector<32x128xf32>
    %cst_28 = arith.constant 0.000000e+00 : f32
    %41 = vector.broadcast %cst_28 : f32 to vector<32x128xf32>
    %42 = arith.maximumf %40, %41 : vector<32x128xf32>
    %cst_29 = arith.constant dense<0.000000e+00> : vector<128xf32>
    %43 = vector.multi_reduction <add>, %42, %cst_29 [0] : vector<32x128xf32> to vector<128xf32>
    %44 = vector.shape_cast %43 : vector<128xf32> to vector<1x128xf32>
    %cst_30 = arith.constant 3.200000e+01 : f32
    %45 = vector.broadcast %cst_30 : f32 to vector<1x128xf32>
    %46 = arith.divf %44, %45 : vector<1x128xf32>
    %47 = vector.broadcast %46 : vector<1x128xf32> to vector<32x128xf32>
    %48 = arith.subf %42, %47 : vector<32x128xf32>
    %49 = arith.mulf %48, %48 : vector<32x128xf32>
    %cst_31 = arith.constant dense<0.000000e+00> : vector<128xf32>
    %50 = vector.multi_reduction <add>, %49, %cst_31 [0] : vector<32x128xf32> to vector<128xf32>
    %51 = vector.shape_cast %50 : vector<128xf32> to vector<1x128xf32>
    %cst_32 = arith.constant 3.200000e+01 : f32
    %52 = vector.broadcast %cst_32 : f32 to vector<1x128xf32>
    %53 = arith.divf %51, %52 : vector<1x128xf32>
    %54 = vector.broadcast %46 : vector<1x128xf32> to vector<32x128xf32>
    %55 = arith.subf %42, %54 : vector<32x128xf32>
    %cst_33 = arith.constant 9.99999974E-6 : f32
    %56 = vector.broadcast %cst_33 : f32 to vector<1x128xf32>
    %57 = arith.addf %53, %56 : vector<1x128xf32>
    %58 = math.rsqrt %57 : vector<1x128xf32>
    %59 = vector.broadcast %58 : vector<1x128xf32> to vector<32x128xf32>
    %60 = arith.mulf %55, %59 : vector<32x128xf32>
    %61 = vector.broadcast %7 : vector<32x1xf32> to vector<32x128xf32>
    %62 = arith.mulf %60, %61 : vector<32x128xf32>
    %63 = vector.broadcast %8 : vector<32x1xf32> to vector<32x128xf32>
    %64 = arith.addf %62, %63 : vector<32x128xf32>
    %cst_34 = arith.constant dense<0.000000e+00> : vector<8x128xf32>
    %65 = tpu.matmul %2, %64, %cst_34 {dimension_numbers = #tpu.dot_dimension_numbers<[1], [0], [0], [1], [0, 0, 1, 1], [], []>} : vector<8x32xf32>, vector<32x128xf32>, vector<8x128xf32> -> vector<8x128xf32>
    %66 = vector.broadcast %9 : vector<8x1xf32> to vector<8x128xf32>
    %67 = arith.addf %65, %66 : vector<8x128xf32>
    %c0_35 = arith.constant 0 : index
    %c0_36 = arith.constant 0 : index
    %68 = vector.load %arg12[%c0_35, %c0_36] : memref<8x128xf32, #tpu.memory_space<vmem>>, vector<8x128xf32>
    tpu.vector_store %arg12[%c0_35, %c0_36], %67 {strides = array<i32>} : memref<8x128xf32, #tpu.memory_space<vmem>>, vector<8x128xf32>,
    return
  }
  func.func @transform_0(%arg0: i32) -> (i32, i32) {
    %c0_i32 = arith.constant 0 : i32
    %c0_i32_0 = arith.constant 0 : i32
    return %c0_i32, %arg0 : i32, i32
  }
  func.func @transform_1(%arg0: i32) -> (i32, i32) {
    %c0_i32 = arith.constant 0 : i32
    %c0_i32_0 = arith.constant 0 : i32
    %c0_i32_1 = arith.constant 0 : i32
    return %c0_i32, %c0_i32_0 : i32, i32
  }
  func.func @transform_2(%arg0: i32) -> (i32, i32) {
    %c0_i32 = arith.constant 0 : i32
    %c0_i32_0 = arith.constant 0 : i32
    %c0_i32_1 = arith.constant 0 : i32
    return %c0_i32, %c0_i32_0 : i32, i32
  }
  func.func @transform_3(%arg0: i32) -> (i32, i32) {
    %c0_i32 = arith.constant 0 : i32
    %c0_i32_0 = arith.constant 0 : i32
    %c0_i32_1 = arith.constant 0 : i32
    return %c0_i32, %c0_i32_0 : i32, i32
  }
  func.func @transform_4(%arg0: i32) -> (i32, i32) {
    %c0_i32 = arith.constant 0 : i32
    %c0_i32_0 = arith.constant 0 : i32
    %c0_i32_1 = arith.constant 0 : i32
    return %c0_i32, %c0_i32_0 : i32, i32
  }
  func.func @transform_5(%arg0: i32) -> (i32, i32) {
    %c0_i32 = arith.constant 0 : i32
    %c0_i32_0 = arith.constant 0 : i32
    %c0_i32_1 = arith.constant 0 : i32
    return %c0_i32, %c0_i32_0 : i32, i32
  }
  func.func @transform_6(%arg0: i32) -> (i32, i32) {
    %c0_i32 = arith.constant 0 : i32
    %c0_i32_0 = arith.constant 0 : i32
    %c0_i32_1 = arith.constant 0 : i32
    return %c0_i32, %c0_i32_0 : i32, i32
  }
  func.func @transform_7(%arg0: i32) -> (i32, i32) {
    %c0_i32 = arith.constant 0 : i32
    %c0_i32_0 = arith.constant 0 : i32
    %c0_i32_1 = arith.constant 0 : i32
    return %c0_i32, %c0_i32_0 : i32, i32
  }
  func.func @transform_8(%arg0: i32) -> (i32, i32) {
    %c0_i32 = arith.constant 0 : i32
    %c0_i32_0 = arith.constant 0 : i32
    %c0_i32_1 = arith.constant 0 : i32
    return %c0_i32, %c0_i32_0 : i32, i32
  }
  func.func @transform_9(%arg0: i32) -> (i32, i32) {
    %c0_i32 = arith.constant 0 : i32
    %c0_i32_0 = arith.constant 0 : i32
    %c0_i32_1 = arith.constant 0 : i32
    return %c0_i32, %c0_i32_0 : i32, i32
  }
  func.func @transform_10(%arg0: i32) -> (i32, i32) {
    %c0_i32 = arith.constant 0 : i32
    %c0_i32_0 = arith.constant 0 : i32
    %c0_i32_1 = arith.constant 0 : i32
    return %c0_i32, %c0_i32_0 : i32, i32
  }
  func.func @transform_11(%arg0: i32) -> (i32, i32) {
    %c0_i32 = arith.constant 0 : i32
    %c0_i32_0 = arith.constant 0 : i32
    return %c0_i32, %arg0 : i32, i32
  }
}

</mosaic_0001>

<llo_original>
// kernel: tpu_custom_call.1
$region0: #{tpu_custom_call.1}
  #allocation0 [shape = 'u32[]', space=smem, size = 0x4, offset = 0x4, fixed_abs, tag = 'smem constant byte address 0x4 - core index']
  #allocation1 [shape = 'u32[144,128]{1,0:T(1,128)}', space=vmem, size = 0x12000, scoped, tag = 'internal scratch']
  %s0 = inlined_call_operand.vmem [shape: f32[16,64], index: 0, kind: input, shape index: {}]
  %s1 = inlined_call_operand.vmem [shape: f32[64,16], index: 1, kind: input, shape index: {}]
  %s2 = inlined_call_operand.vmem [shape: f32[64,1], index: 2, kind: input, shape index: {}]
  %s3 = inlined_call_operand.vmem [shape: f32[64,1], index: 3, kind: input, shape index: {}]
  %s4 = inlined_call_operand.vmem [shape: f32[64,1], index: 4, kind: input, shape index: {}]
  %s5 = inlined_call_operand.vmem [shape: f32[32,64], index: 5, kind: input, shape index: {}]
  %s6 = inlined_call_operand.vmem [shape: f32[32,1], index: 6, kind: input, shape index: {}]
  %s7 = inlined_call_operand.vmem [shape: f32[32,1], index: 7, kind: input, shape index: {}]
  %s8 = inlined_call_operand.vmem [shape: f32[32,1], index: 8, kind: input, shape index: {}]
  %s9 = inlined_call_operand.vmem [shape: f32[8,32], index: 9, kind: input, shape index: {}]
  %s10 = inlined_call_operand.vmem [shape: f32[8,1], index: 10, kind: input, shape index: {}]
  %s11 = inlined_call_operand.hbm [shape: f32[8,64], index: 11, kind: output, shape index: {}]
  %s12 = sld [smem:[#allocation0]]
  $region54: #{tpu_custom_call.1} parent=0
    _
  %s14 = ssub.s32 1, %s12
  %s15 = scalar_select 0, %s14, %s12
  $region1: #{tpu_custom_call.1} parent=0
    #allocation2 [shape = 'u8[4096]{0}', space=vmem, size = 0x1000, scoped, tag = 'output window, operand 0, single buffered']
    #allocation3 [shape = 's32[1]{0}', space=sflag, size = 0x4, scoped, tag = 'scoped memory for tpu_custom_call.1']
    %16 = vsyncpa [#allocation3], 0
    // Predicated region
    $region2: #{tpu_custom_call.1} parent=1 // pred_check
      _
    $region3: #{tpu_custom_call.1} parent=1 // pred_check_branch
      %18 = sbr.rel (0) target = $region5
    $region4: #{tpu_custom_call.1} parent=1 // pred_region
      _
    $region5: #{tpu_custom_call.1} parent=1 // pred_fallthru
      _
    // Predicated region
    $region6: #{tpu_custom_call.1} parent=1 // pred_check
      _
    $region7: #{tpu_custom_call.1} parent=1 // pred_check_branch
      %20 = sbr.rel (0) target = $region9
    $region8: #{tpu_custom_call.1} parent=1 // pred_region
      _
    $region9: #{tpu_custom_call.1} parent=1 // pred_fallthru
      _
    // Predicated region
    $region10: #{tpu_custom_call.1} parent=1 // pred_check
      _
    $region11: #{tpu_custom_call.1} parent=1 // pred_check_branch
      %22 = sbr.rel (0) target = $region13
    $region12: #{tpu_custom_call.1} parent=1 // pred_region
      _
    $region13: #{tpu_custom_call.1} parent=1 // pred_fallthru
      _
    // Predicated region
    $region14: #{tpu_custom_call.1} parent=1 // pred_check
      _
    $region15: #{tpu_custom_call.1} parent=1 // pred_check_branch
      %24 = sbr.rel (0) target = $region17
    $region16: #{tpu_custom_call.1} parent=1 // pred_region
      _
    $region17: #{tpu_custom_call.1} parent=1 // pred_fallthru
      _
    // Predicated region
    $region18: #{tpu_custom_call.1} parent=1 // pred_check
      _
    $region19: #{tpu_custom_call.1} parent=1 // pred_check_branch
      %26 = sbr.rel (0) target = $region21
    $region20: #{tpu_custom_call.1} parent=1 // pred_region
      _
    $region21: #{tpu_custom_call.1} parent=1 // pred_fallthru
      _
    // Predicated region
    $region22: #{tpu_custom_call.1} parent=1 // pred_check
      _
    $region23: #{tpu_custom_call.1} parent=1 // pred_check_branch
      %28 = sbr.rel (0) target = $region25
    $region24: #{tpu_custom_call.1} parent=1 // pred_region
      _
    $region25: #{tpu_custom_call.1} parent=1 // pred_fallthru
      _
    // Predicated region
    $region26: #{tpu_custom_call.1} parent=1 // pred_check
      _
    $region27: #{tpu_custom_call.1} parent=1 // pred_check_branch
      %30 = sbr.rel (0) target = $region29
    $region28: #{tpu_custom_call.1} parent=1 // pred_region
      _
    $region29: #{tpu_custom_call.1} parent=1 // pred_fallthru
      _
    // Predicated region
    $region30: #{tpu_custom_call.1} parent=1 // pred_check
      _
    $region31: #{tpu_custom_call.1} parent=1 // pred_check_branch
      %32 = sbr.rel (0) target = $region33
    $region32: #{tpu_custom_call.1} parent=1 // pred_region
      _
    $region33: #{tpu_custom_call.1} parent=1 // pred_fallthru
      _
    // Predicated region
    $region34: #{tpu_custom_call.1} parent=1 // pred_check
      _
    $region35: #{tpu_custom_call.1} parent=1 // pred_check_branch
      %34 = sbr.rel (0) target = $region37
    $region36: #{tpu_custom_call.1} parent=1 // pred_region
      _
    $region37: #{tpu_custom_call.1} parent=1 // pred_fallthru
      _
    // Predicated region
    $region38: #{tpu_custom_call.1} parent=1 // pred_check
      _
    $region39: #{tpu_custom_call.1} parent=1 // pred_check_branch
      %36 = sbr.rel (0) target = $region41
    $region40: #{tpu_custom_call.1} parent=1 // pred_region
      _
    $region41: #{tpu_custom_call.1} parent=1 // pred_fallthru
      _
    // Predicated region
    $region42: #{tpu_custom_call.1} parent=1 // pred_check
      _
    $region43: #{tpu_custom_call.1} parent=1 // pred_check_branch
      %38 = sbr.rel (0) target = $region45
    $region44: #{tpu_custom_call.1} parent=1 // pred_region
      _
    $region45: #{tpu_custom_call.1} parent=1 // pred_fallthru
      _
    %v39 = vld [vmem:[%s1] sm:$0xff]
    %v40 = vld [vmem:[%s1 + $0x8] sm:$0xff]
    %v41 = vld [vmem:[%s1 + $0x10] sm:$0xff]
    %v42 = vld [vmem:[%s1 + $0x18] sm:$0xff]
    %v43 = vld [vmem:[%s1 + $0x20] sm:$0xff]
    %v44 = vld [vmem:[%s1 + $0x28] sm:$0xff]
    %v45 = vld [vmem:[%s1 + $0x30] sm:$0xff]
    %v46 = vld [vmem:[%s1 + $0x38] sm:$0xff]
    %v47 = vld [vmem:[%s5] sm:$0xff]
    %v48 = vld [vmem:[%s5 + $0x8] sm:$0xff]
    %v49 = vld [vmem:[%s5 + $0x10] sm:$0xff]
    %v50 = vld [vmem:[%s5 + $0x18] sm:$0xff]
    %v51 = vld [vmem:[%s9] sm:$0xff]
    %v52 = vld [vmem:[%s2] sm:$0xff]
    %v53 = vld [vmem:[%s2 + $0x8] sm:$0xff]
    %v54 = vld [vmem:[%s2 + $0x10] sm:$0xff]
    %v55 = vld [vmem:[%s2 + $0x18] sm:$0xff]
    %v56 = vld [vmem:[%s2 + $0x20] sm:$0xff]
    %v57 = vld [vmem:[%s2 + $0x28] sm:$0xff]
    %v58 = vld [vmem:[%s2 + $0x30] sm:$0xff]
    %v59 = vld [vmem:[%s2 + $0x38] sm:$0xff]
    %v60 = vld [vmem:[%s3] sm:$0xff]
    %v61 = vld [vmem:[%s3 + $0x8] sm:$0xff]
    %v62 = vld [vmem:[%s3 + $0x10] sm:$0xff]
    %v63 = vld [vmem:[%s3 + $0x18] sm:$0xff]
    %v64 = vld [vmem:[%s3 + $0x20] sm:$0xff]
    %v65 = vld [vmem:[%s3 + $0x28] sm:$0xff]
    %v66 = vld [vmem:[%s3 + $0x30] sm:$0xff]
    %v67 = vld [vmem:[%s3 + $0x38] sm:$0xff]
    %v68 = vld [vmem:[%s4] sm:$0xff]
    %v69 = vld [vmem:[%s4 + $0x8] sm:$0xff]
    %v70 = vld [vmem:[%s4 + $0x10] sm:$0xff]
    %v71 = vld [vmem:[%s4 + $0x18] sm:$0xff]
    %v72 = vld [vmem:[%s4 + $0x20] sm:$0xff]
    %v73 = vld [vmem:[%s4 + $0x28] sm:$0xff]
    %v74 = vld [vmem:[%s4 + $0x30] sm:$0xff]
    %v75 = vld [vmem:[%s4 + $0x38] sm:$0xff]
    %v76 = vld [vmem:[%s6] sm:$0xff]
    %v77 = vld [vmem:[%s6 + $0x8] sm:$0xff]
    %v78 = vld [vmem:[%s6 + $0x10] sm:$0xff]
    %v79 = vld [vmem:[%s6 + $0x18] sm:$0xff]
    %v80 = vld [vmem:[%s7] sm:$0xff]
    %v81 = vld [vmem:[%s7 + $0x8] sm:$0xff]
    %v82 = vld [vmem:[%s7 + $0x10] sm:$0xff]
    %v83 = vld [vmem:[%s7 + $0x18] sm:$0xff]
    %v84 = vld [vmem:[%s8] sm:$0xff]
    %v85 = vld [vmem:[%s8 + $0x8] sm:$0xff]
    %v86 = vld [vmem:[%s8 + $0x10] sm:$0xff]
    %v87 = vld [vmem:[%s8 + $0x18] sm:$0xff]
    %v88 = vld [vmem:[%s10] sm:$0xff]
    %v89 = vld [vmem:[%s0] sm:$0xff]
    %v90 = vld [vmem:[%s0 + $0x8] sm:$0xff]
    %92 = vset.pattern.permute.xlu0 0
    %93 = vperm.xlu0 %92, %v52
    %v94 = vpop.permute.xlu0 %93
    %97 = vset.pattern.permute.xlu0 0
    %98 = vperm.xlu0 %97, %v53
    %v99 = vpop.permute.xlu0 %98
    %102 = vset.pattern.permute.xlu0 0
    %103 = vperm.xlu0 %102, %v54
    %v104 = vpop.permute.xlu0 %103
    %107 = vset.pattern.permute.xlu0 0
    %108 = vperm.xlu0 %107, %v55
    %v109 = vpop.permute.xlu0 %108
    %112 = vset.pattern.permute.xlu0 0
    %113 = vperm.xlu0 %112, %v56
    %v114 = vpop.permute.xlu0 %113
    %117 = vset.pattern.permute.xlu0 0
    %118 = vperm.xlu0 %117, %v57
    %v119 = vpop.permute.xlu0 %118
    %122 = vset.pattern.permute.xlu0 0
    %123 = vperm.xlu0 %122, %v58
    %v124 = vpop.permute.xlu0 %123
    %127 = vset.pattern.permute.xlu0 0
    %128 = vperm.xlu0 %127, %v59
    %v129 = vpop.permute.xlu0 %128
    %vm131 = vcmask 130048
    %v133 = vsel %vm131, %v39, 0
    %v136 = vsel %vm131, %v40, 0
    %v139 = vsel %vm131, %v41, 0
    %v142 = vsel %vm131, %v42, 0
    %v145 = vsel %vm131, %v43, 0
    %v148 = vsel %vm131, %v44, 0
    %v151 = vsel %vm131, %v45, 0
    %v154 = vsel %vm131, %v46, 0
    %156 = vmatprep.subr.mxu0 0.0
    %157 = vmatpush1.msra.mxu0 %v89
    %158 = vmatprep.subr.mxu0 0.0
    %159 = vmatpush1.msra.mxu0 %v90
    %160 = vmatprep.subr.mxu0 0.0
    %161 = vmatpush1.msra.mxu0 0.0
    %162 = vmatprep.subr.mxu0 0.0
    %163 = vmatpush1.msra.mxu0 0.0
    %164 = vmatprep.subr.mxu0 0.0
    %165 = vmatpush1.msra.mxu0 0.0
    %166 = vmatprep.subr.mxu0 0.0
    %167 = vmatpush1.msra.mxu0 0.0
    %168 = vmatprep.subr.mxu0 0.0
    %169 = vmatpush1.msra.mxu0 0.0
    %170 = vmatprep.subr.mxu0 0.0
    %171 = vmatpush1.msra.mxu0 0.0
    %172 = vmatprep.subr.mxu0 0.0
    %173 = vmatpush1.msra.mxu0 0.0
    %174 = vmatprep.subr.mxu0 0.0
    %175 = vmatpush1.msra.mxu0 0.0
    %176 = vmatprep.subr.mxu0 0.0
    %177 = vmatpush1.msra.mxu0 0.0
    %178 = vmatprep.subr.mxu0 0.0
    %179 = vmatpush1.msra.mxu0 0.0
    %180 = vmatprep.subr.mxu0 0.0
    %181 = vmatpush1.msra.mxu0 0.0
    %182 = vmatprep.subr.mxu0 0.0
    %183 = vmatpush1.msra.mxu0 0.0
    %184 = vmatprep.subr.mxu0 0.0
    %185 = vmatpush1.msra.mxu0 0.0
    %186 = vmatprep.subr.mxu0 0.0
    %187 = vmatpush1.msra.mxu0 0.0
    %188 = vmatprep.subr.mxu0 0.0
    %189 = vmatpush1.msra.mxu0 0.0
    %190 = vmatprep.subr.mxu0 0.0
    %191 = vmatpush1.msra.mxu0 0.0
    %192 = vmatprep.subr.mxu0 0.0
    %193 = vmatpush1.msra.mxu0 0.0
    %194 = vmatprep.subr.mxu0 0.0
    %195 = vmatpush1.msra.mxu0 0.0
    %196 = vmatprep.subr.mxu0 0.0
    %197 = vmatpush1.msra.mxu0 0.0
    %198 = vmatprep.subr.mxu0 0.0
    %199 = vmatpush1.msra.mxu0 0.0
    %200 = vmatprep.subr.mxu0 0.0
    %201 = vmatpush1.msra.mxu0 0.0
    %202 = vmatprep.subr.mxu0 0.0
    %203 = vmatpush1.msra.mxu0 0.0
    %204 = vmatprep.subr.mxu0 0.0
    %205 = vmatpush1.msra.mxu0 0.0
    %206 = vmatprep.subr.mxu0 0.0
    %207 = vmatpush1.msra.mxu0 0.0
    %208 = vmatprep.subr.mxu0 0.0
    %209 = vmatpush1.msra.mxu0 0.0
    %210 = vmatprep.subr.mxu0 0.0
    %211 = vmatpush1.msra.mxu0 0.0
    %212 = vmatprep.subr.mxu0 0.0
    %213 = vmatpush1.msra.mxu0 0.0
    %214 = vmatprep.subr.mxu0 0.0
    %215 = vmatpush1.msra.mxu0 0.0
    %216 = vmatprep.subr.mxu0 0.0
    %217 = vmatpush1.msra.mxu0 0.0
    %218 = vmatprep.subr.mxu0 0.0
    %219 = vmatpush1.msra.mxu0 0.0
    %220 = vmatprep.mubr.f32.mxu0 0.0
    %221 = vmatmul.mubr.f32.gmra.mrb[0].mxu0 %v133
    %v222 = vpop.f32.mrb[0].mxu0
    %v223 = vadd.f32 %v94, %v222
    %v224 = vpop.f32.mrb[0].mxu0
    %225 = vmatprep.mubr.f32.mxu0 0.0
    %226 = vmatmul.mubr.f32.gmra.mrb[0].mxu0 %v136
    %v227 = vpop.f32.mrb[0].mxu0
    %v228 = vadd.f32 %v99, %v227
    %v229 = vpop.f32.mrb[0].mxu0
    %230 = vmatprep.mubr.f32.mxu0 0.0
    %231 = vmatmul.mubr.f32.gmra.mrb[0].mxu0 %v139
    %v232 = vpop.f32.mrb[0].mxu0
    %v233 = vadd.f32 %v104, %v232
    %v234 = vpop.f32.mrb[0].mxu0
    %235 = vmatprep.mubr.f32.mxu0 0.0
    %236 = vmatmul.mubr.f32.gmra.mrb[0].mxu0 %v142
    %v237 = vpop.f32.mrb[0].mxu0
    %v238 = vadd.f32 %v109, %v237
    %v239 = vpop.f32.mrb[0].mxu0
    %240 = vmatprep.mubr.f32.mxu0 0.0
    %241 = vmatmul.mubr.f32.gmra.mrb[0].mxu0 %v145
    %v242 = vpop.f32.mrb[0].mxu0
    %v243 = vadd.f32 %v114, %v242
    %v244 = vpop.f32.mrb[0].mxu0
    %245 = vmatprep.mubr.f32.mxu0 0.0
    %246 = vmatmul.mubr.f32.gmra.mrb[0].mxu0 %v148
    %v247 = vpop.f32.mrb[0].mxu0
    %v248 = vadd.f32 %v119, %v247
    %v249 = vpop.f32.mrb[0].mxu0
    %250 = vmatprep.mubr.f32.mxu0 0.0
    %251 = vmatmul.mubr.f32.gmra.mrb[0].mxu0 %v151
    %v252 = vpop.f32.mrb[0].mxu0
    %v253 = vadd.f32 %v124, %v252
    %v254 = vpop.f32.mrb[0].mxu0
    %255 = vmatprep.mubr.f32.mxu0 0.0
    %256 = vmatmul.mubr.f32.gmra.mrb[0].mxu0 %v154
    %v257 = vpop.f32.mrb[0].mxu0
    %v258 = vadd.f32 %v129, %v257
    %v259 = vpop.f32.mrb[0].mxu0
    %260 = vdwg.mxu0
    %v261 = vmax.f32 %v223, 0.0
    %v262 = vmax.f32 %v228, 0.0
    %v263 = vmax.f32 %v233, 0.0
    %v264 = vmax.f32 %v238, 0.0
    %v265 = vmax.f32 %v243, 0.0
    %v266 = vmax.f32 %v248, 0.0
    %v267 = vmax.f32 %v253, 0.0
    %v268 = vmax.f32 %v258, 0.0
    %v269 = vadd.f32 %v261, %v262
    %v270 = vadd.f32 %v269, %v263
    %v271 = vadd.f32 %v270, %v264
    %v272 = vadd.f32 %v271, %v265
    %v273 = vadd.f32 %v272, %v266
    %v274 = vadd.f32 %v273, %v267
    %v275 = vadd.f32 %v274, %v268
    %v276 = vrot.slane %v275, 4
    %v277 = vadd.f32 %v275, %v276
    %v278 = vrot.slane %v277, 2
    %v279 = vadd.f32 %v277, %v278
    %v280 = vrot.slane %v279, 1
    %v281 = vadd.f32 %v279, %v280
    %v282 = vrcp.pop 64.0
    %v283 = vmul.f32 %v281, %v282
    %v284 = vsub.f32 %v261, %v283
    %v285 = vsub.f32 %v262, %v283
    %v286 = vsub.f32 %v263, %v283
    %v287 = vsub.f32 %v264, %v283
    %v288 = vsub.f32 %v265, %v283
    %v289 = vsub.f32 %v266, %v283
    %v290 = vsub.f32 %v267, %v283
    %v291 = vsub.f32 %v268, %v283
    %v292 = vmul.f32 %v284, %v284
    %v293 = vmul.f32 %v285, %v285
    %v294 = vmul.f32 %v286, %v286
    %v295 = vmul.f32 %v287, %v287
    %v296 = vmul.f32 %v288, %v288
    %v297 = vmul.f32 %v289, %v289
    %v298 = vmul.f32 %v290, %v290
    %v299 = vmul.f32 %v291, %v291
    %v300 = vadd.f32 %v292, %v293
    %v301 = vadd.f32 %v300, %v294
    %v302 = vadd.f32 %v301, %v295
    %v303 = vadd.f32 %v302, %v296
    %v304 = vadd.f32 %v303, %v297
    %v305 = vadd.f32 %v304, %v298
    %v306 = vadd.f32 %v305, %v299
    %v307 = vrot.slane %v306, 4
    %v308 = vadd.f32 %v306, %v307
    %v309 = vrot.slane %v308, 2
    %v310 = vadd.f32 %v308, %v309
    %v311 = vrot.slane %v310, 1
    %v312 = vadd.f32 %v310, %v311
    %v313 = vmul.f32 %v312, %v282
    %v314 = vadd.f32 %v313, 1e-05
    %v315 = vrsqrt.pop %v314
    %v316 = vmul.f32 %v284, %v315
    %v317 = vmul.f32 %v285, %v315
    %v318 = vmul.f32 %v286, %v315
    %v319 = vmul.f32 %v287, %v315
    %v320 = vmul.f32 %v288, %v315
    %v321 = vmul.f32 %v289, %v315
    %v322 = vmul.f32 %v290, %v315
    %v323 = vmul.f32 %v291, %v315
    %325 = vset.pattern.permute.xlu0 0
    %326 = vperm.xlu0 %325, %v60
    %v327 = vpop.permute.xlu0 %326
    %330 = vset.pattern.permute.xlu0 0
    %331 = vperm.xlu0 %330, %v61
    %v332 = vpop.permute.xlu0 %331
    %335 = vset.pattern.permute.xlu0 0
    %336 = vperm.xlu0 %335, %v62
    %v337 = vpop.permute.xlu0 %336
    %340 = vset.pattern.permute.xlu0 0
    %341 = vperm.xlu0 %340, %v63
    %v342 = vpop.permute.xlu0 %341
    %345 = vset.pattern.permute.xlu0 0
    %346 = vperm.xlu0 %345, %v64
    %v347 = vpop.permute.xlu0 %346
    %350 = vset.pattern.permute.xlu0 0
    %351 = vperm.xlu0 %350, %v65
    %v352 = vpop.permute.xlu0 %351
    %355 = vset.pattern.permute.xlu0 0
    %356 = vperm.xlu0 %355, %v66
    %v357 = vpop.permute.xlu0 %356
    %360 = vset.pattern.permute.xlu0 0
    %361 = vperm.xlu0 %360, %v67
    %v362 = vpop.permute.xlu0 %361
    %v364 = vmul.f32 %v316, %v327
    %v365 = vmul.f32 %v317, %v332
    %v366 = vmul.f32 %v318, %v337
    %v367 = vmul.f32 %v319, %v342
    %v368 = vmul.f32 %v320, %v347
    %v369 = vmul.f32 %v321, %v352
    %v370 = vmul.f32 %v322, %v357
    %v371 = vmul.f32 %v323, %v362
    %373 = vset.pattern.permute.xlu0 0
    %374 = vperm.xlu0 %373, %v68
    %v375 = vpop.permute.xlu0 %374
    %378 = vset.pattern.permute.xlu0 0
    %379 = vperm.xlu0 %378, %v69
    %v380 = vpop.permute.xlu0 %379
    %383 = vset.pattern.permute.xlu0 0
    %384 = vperm.xlu0 %383, %v70
    %v385 = vpop.permute.xlu0 %384
    %388 = vset.pattern.permute.xlu0 0
    %389 = vperm.xlu0 %388, %v71
    %v390 = vpop.permute.xlu0 %389
    %393 = vset.pattern.permute.xlu0 0
    %394 = vperm.xlu0 %393, %v72
    %v395 = vpop.permute.xlu0 %394
    %398 = vset.pattern.permute.xlu0 0
    %399 = vperm.xlu0 %398, %v73
    %v400 = vpop.permute.xlu0 %399
    %403 = vset.pattern.permute.xlu0 0
    %404 = vperm.xlu0 %403, %v74
    %v405 = vpop.permute.xlu0 %404
    %408 = vset.pattern.permute.xlu0 0
    %409 = vperm.xlu0 %408, %v75
    %v410 = vpop.permute.xlu0 %409
    %v412 = vadd.f32 %v364, %v375
    %v413 = vadd.f32 %v365, %v380
    %v414 = vadd.f32 %v366, %v385
    %v415 = vadd.f32 %v367, %v390
    %v416 = vadd.f32 %v368, %v395
    %v417 = vadd.f32 %v369, %v400
    %v418 = vadd.f32 %v370, %v405
    %v419 = vadd.f32 %v371, %v410
    %421 = vset.pattern.permute.xlu0 0
    %422 = vperm.xlu0 %421, %v76
    %v423 = vpop.permute.xlu0 %422
    %426 = vset.pattern.permute.xlu0 0
    %427 = vperm.xlu0 %426, %v77
    %v428 = vpop.permute.xlu0 %427
    %431 = vset.pattern.permute.xlu0 0
    %432 = vperm.xlu0 %431, %v78
    %v433 = vpop.permute.xlu0 %432
    %436 = vset.pattern.permute.xlu0 0
    %437 = vperm.xlu0 %436, %v79
    %v438 = vpop.permute.xlu0 %437
    %vm440 = vcmask 523264
    %v442 = vsel %vm440, %v47, 0
    %v445 = vsel %vm440, %v48, 0
    %v448 = vsel %vm440, %v49, 0
    %v451 = vsel %vm440, %v50, 0
    %453 = vmatprep.subr.mxu0 0.0
    %454 = vmatpush1.msra.mxu0 %v412
    %455 = vmatprep.subr.mxu0 0.0
    %456 = vmatpush1.msra.mxu0 %v413
    %457 = vmatprep.subr.mxu0 0.0
    %458 = vmatpush1.msra.mxu0 %v414
    %459 = vmatprep.subr.mxu0 0.0
    %460 = vmatpush1.msra.mxu0 %v415
    %461 = vmatprep.subr.mxu0 0.0
    %462 = vmatpush1.msra.mxu0 %v416
    %463 = vmatprep.subr.mxu0 0.0
    %464 = vmatpush1.msra.mxu0 %v417
    %465 = vmatprep.subr.mxu0 0.0
    %466 = vmatpush1.msra.mxu0 %v418
    %467 = vmatprep.subr.mxu0 0.0
    %468 = vmatpush1.msra.mxu0 %v419
    %469 = vmatprep.subr.mxu0 0.0
    %470 = vmatpush1.msra.mxu0 0.0
    %471 = vmatprep.subr.mxu0 0.0
    %472 = vmatpush1.msra.mxu0 0.0
    %473 = vmatprep.subr.mxu0 0.0
    %474 = vmatpush1.msra.mxu0 0.0
    %475 = vmatprep.subr.mxu0 0.0
    %476 = vmatpush1.msra.mxu0 0.0
    %477 = vmatprep.subr.mxu0 0.0
    %478 = vmatpush1.msra.mxu0 0.0
    %479 = vmatprep.subr.mxu0 0.0
    %480 = vmatpush1.msra.mxu0 0.0
    %481 = vmatprep.subr.mxu0 0.0
    %482 = vmatpush1.msra.mxu0 0.0
    %483 = vmatprep.subr.mxu0 0.0
    %484 = vmatpush1.msra.mxu0 0.0
    %485 = vmatprep.subr.mxu0 0.0
    %486 = vmatpush1.msra.mxu0 0.0
    %487 = vmatprep.subr.mxu0 0.0
    %488 = vmatpush1.msra.mxu0 0.0
    %489 = vmatprep.subr.mxu0 0.0
    %490 = vmatpush1.msra.mxu0 0.0
    %491 = vmatprep.subr.mxu0 0.0
    %492 = vmatpush1.msra.mxu0 0.0
    %493 = vmatprep.subr.mxu0 0.0
    %494 = vmatpush1.msra.mxu0 0.0
    %495 = vmatprep.subr.mxu0 0.0
    %496 = vmatpush1.msra.mxu0 0.0
    %497 = vmatprep.subr.mxu0 0.0
    %498 = vmatpush1.msra.mxu0 0.0
    %499 = vmatprep.subr.mxu0 0.0
    %500 = vmatpush1.msra.mxu0 0.0
    %501 = vmatprep.subr.mxu0 0.0
    %502 = vmatpush1.msra.mxu0 0.0
    %503 = vmatprep.subr.mxu0 0.0
    %504 = vmatpush1.msra.mxu0 0.0
    %505 = vmatprep.subr.mxu0 0.0
    %506 = vmatpush1.msra.mxu0 0.0
    %507 = vmatprep.subr.mxu0 0.0
    %508 = vmatpush1.msra.mxu0 0.0
    %509 = vmatprep.subr.mxu0 0.0
    %510 = vmatpush1.msra.mxu0 0.0
    %511 = vmatprep.subr.mxu0 0.0
    %512 = vmatpush1.msra.mxu0 0.0
    %513 = vmatprep.subr.mxu0 0.0
    %514 = vmatpush1.msra.mxu0 0.0
    %515 = vmatprep.subr.mxu0 0.0
    %516 = vmatpush1.msra.mxu0 0.0
    %517 = vmatprep.mubr.f32.mxu0 0.0
    %518 = vmatmul.mubr.f32.gmra.mrb[0].mxu0 %v442
    %v519 = vpop.f32.mrb[0].mxu0
    %v520 = vadd.f32 %v423, %v519
    %v521 = vpop.f32.mrb[0].mxu0
    %522 = vmatprep.mubr.f32.mxu0 0.0
    %523 = vmatmul.mubr.f32.gmra.mrb[0].mxu0 %v445
    %v524 = vpop.f32.mrb[0].mxu0
    %v525 = vadd.f32 %v428, %v524
    %v526 = vpop.f32.mrb[0].mxu0
    %527 = vmatprep.mubr.f32.mxu0 0.0
    %528 = vmatmul.mubr.f32.gmra.mrb[0].mxu0 %v448
    %v529 = vpop.f32.mrb[0].mxu0
    %v530 = vadd.f32 %v433, %v529
    %v531 = vpop.f32.mrb[0].mxu0
    %532 = vmatprep.mubr.f32.mxu0 0.0
    %533 = vmatmul.mubr.f32.gmra.mrb[0].mxu0 %v451
    %v534 = vpop.f32.mrb[0].mxu0
    %v535 = vadd.f32 %v438, %v534
    %v536 = vpop.f32.mrb[0].mxu0
    %537 = vdwg.mxu0
    %v538 = vmax.f32 %v520, 0.0
    %v539 = vmax.f32 %v525, 0.0
    %v540 = vmax.f32 %v530, 0.0
    %v541 = vmax.f32 %v535, 0.0
    %v542 = vadd.f32 %v538, %v539
    %v543 = vadd.f32 %v542, %v540
    %v544 = vadd.f32 %v543, %v541
    %v545 = vrot.slane %v544, 4
    %v546 = vadd.f32 %v544, %v545
    %v547 = vrot.slane %v546, 2
    %v548 = vadd.f32 %v546, %v547
    %v549 = vrot.slane %v548, 1
    %v550 = vadd.f32 %v548, %v549
    %v551 = vrcp.pop 32.0
    %v552 = vmul.f32 %v550, %v551
    %v553 = vsub.f32 %v538, %v552
    %v554 = vsub.f32 %v539, %v552
    %v555 = vsub.f32 %v540, %v552
    %v556 = vsub.f32 %v541, %v552
    %v557 = vmul.f32 %v553, %v553
    %v558 = vmul.f32 %v554, %v554
    %v559 = vmul.f32 %v555, %v555
    %v560 = vmul.f32 %v556, %v556
    %v561 = vadd.f32 %v557, %v558
    %v562 = vadd.f32 %v561, %v559
    %v563 = vadd.f32 %v562, %v560
    %v564 = vrot.slane %v563, 4
    %v565 = vadd.f32 %v563, %v564
    %v566 = vrot.slane %v565, 2
    %v567 = vadd.f32 %v565, %v566
    %v568 = vrot.slane %v567, 1
    %v569 = vadd.f32 %v567, %v568
    %v570 = vmul.f32 %v569, %v551
    %v571 = vadd.f32 %v570, 1e-05
    %v572 = vrsqrt.pop %v571
    %v573 = vmul.f32 %v553, %v572
    %v574 = vmul.f32 %v554, %v572
    %v575 = vmul.f32 %v555, %v572
    %v576 = vmul.f32 %v556, %v572
    %578 = vset.pattern.permute.xlu0 0
    %579 = vperm.xlu0 %578, %v80
    %v580 = vpop.permute.xlu0 %579
    %583 = vset.pattern.permute.xlu0 0
    %584 = vperm.xlu0 %583, %v81
    %v585 = vpop.permute.xlu0 %584
    %588 = vset.pattern.permute.xlu0 0
    %589 = vperm.xlu0 %588, %v82
    %v590 = vpop.permute.xlu0 %589
    %593 = vset.pattern.permute.xlu0 0
    %594 = vperm.xlu0 %593, %v83
    %v595 = vpop.permute.xlu0 %594
    %v597 = vmul.f32 %v573, %v580
    %v598 = vmul.f32 %v574, %v585
    %v599 = vmul.f32 %v575, %v590
    %v600 = vmul.f32 %v576, %v595
    %602 = vset.pattern.permute.xlu0 0
    %603 = vperm.xlu0 %602, %v84
    %v604 = vpop.permute.xlu0 %603
    %607 = vset.pattern.permute.xlu0 0
    %608 = vperm.xlu0 %607, %v85
    %v609 = vpop.permute.xlu0 %608
    %612 = vset.pattern.permute.xlu0 0
    %613 = vperm.xlu0 %612, %v86
    %v614 = vpop.permute.xlu0 %613
    %617 = vset.pattern.permute.xlu0 0
    %618 = vperm.xlu0 %617, %v87
    %v619 = vpop.permute.xlu0 %618
    %v621 = vadd.f32 %v597, %v604
    %v622 = vadd.f32 %v598, %v609
    %v623 = vadd.f32 %v599, %v614
    %v624 = vadd.f32 %v600, %v619
    %626 = vset.pattern.permute.xlu0 0
    %627 = vperm.xlu0 %626, %v88
    %v628 = vpop.permute.xlu0 %627
    %vm630 = vcmask 261120
    %v632 = vsel %vm630, %v51, 0
    %634 = vmatprep.subr.mxu0 0.0
    %635 = vmatpush1.msra.mxu0 %v621
    %636 = vmatprep.subr.mxu0 0.0
    %637 = vmatpush1.msra.mxu0 %v622
    %638 = vmatprep.subr.mxu0 0.0
    %639 = vmatpush1.msra.mxu0 %v623
    %640 = vmatprep.subr.mxu0 0.0
    %641 = vmatpush1.msra.mxu0 %v624
    %642 = vmatprep.subr.mxu0 0.0
    %643 = vmatpush1.msra.mxu0 0.0
    %644 = vmatprep.subr.mxu0 0.0
    %645 = vmatpush1.msra.mxu0 0.0
    %646 = vmatprep.subr.mxu0 0.0
    %647 = vmatpush1.msra.mxu0 0.0
    %648 = vmatprep.subr.mxu0 0.0
    %649 = vmatpush1.msra.mxu0 0.0
    %650 = vmatprep.subr.mxu0 0.0
    %651 = vmatpush1.msra.mxu0 0.0
    %652 = vmatprep.subr.mxu0 0.0
    %653 = vmatpush1.msra.mxu0 0.0
    %654 = vmatprep.subr.mxu0 0.0
    %655 = vmatpush1.msra.mxu0 0.0
    %656 = vmatprep.subr.mxu0 0.0
    %657 = vmatpush1.msra.mxu0 0.0
    %658 = vmatprep.subr.mxu0 0.0
    %659 = vmatpush1.msra.mxu0 0.0
    %660 = vmatprep.subr.mxu0 0.0
    %661 = vmatpush1.msra.mxu0 0.0
    %662 = vmatprep.subr.mxu0 0.0
    %663 = vmatpush1.msra.mxu0 0.0
    %664 = vmatprep.subr.mxu0 0.0
    %665 = vmatpush1.msra.mxu0 0.0
    %666 = vmatprep.subr.mxu0 0.0
    %667 = vmatpush1.msra.mxu0 0.0
    %668 = vmatprep.subr.mxu0 0.0
    %669 = vmatpush1.msra.mxu0 0.0
    %670 = vmatprep.subr.mxu0 0.0
    %671 = vmatpush1.msra.mxu0 0.0
    %672 = vmatprep.subr.mxu0 0.0
    %673 = vmatpush1.msra.mxu0 0.0
    %674 = vmatprep.subr.mxu0 0.0
    %675 = vmatpush1.msra.mxu0 0.0
    %676 = vmatprep.subr.mxu0 0.0
    %677 = vmatpush1.msra.mxu0 0.0
    %678 = vmatprep.subr.mxu0 0.0
    %679 = vmatpush1.msra.mxu0 0.0
    %680 = vmatprep.subr.mxu0 0.0
    %681 = vmatpush1.msra.mxu0 0.0
    %682 = vmatprep.subr.mxu0 0.0
    %683 = vmatpush1.msra.mxu0 0.0
    %684 = vmatprep.subr.mxu0 0.0
    %685 = vmatpush1.msra.mxu0 0.0
    %686 = vmatprep.subr.mxu0 0.0
    %687 = vmatpush1.msra.mxu0 0.0
    %688 = vmatprep.subr.mxu0 0.0
    %689 = vmatpush1.msra.mxu0 0.0
    %690 = vmatprep.subr.mxu0 0.0
    %691 = vmatpush1.msra.mxu0 0.0
    %692 = vmatprep.subr.mxu0 0.0
    %693 = vmatpush1.msra.mxu0 0.0
    %694 = vmatprep.subr.mxu0 0.0
    %695 = vmatpush1.msra.mxu0 0.0
    %696 = vmatprep.subr.mxu0 0.0
    %697 = vmatpush1.msra.mxu0 0.0
    %698 = vmatprep.mubr.f32.mxu0 0.0
    %699 = vmatmul.mubr.f32.gmra.mrb[0].mxu0 %v632
    %v700 = vpop.f32.mrb[0].mxu0
    %v701 = vadd.f32 %v628, %v700
    %v702 = vpop.f32.mrb[0].mxu0
    %703 = vdwg.mxu0
    %704 = vst [vmem:[#allocation2] sm:$0xff] %v701
    // Predicated region
    $region46: #{tpu_custom_call.1} parent=1 // pred_check
      _
    $region47: #{tpu_custom_call.1} parent=1 // pred_check_branch
      %706 = sbr.rel (0) target = $region49
    $region48: #{tpu_custom_call.1} parent=1 // pred_region
      %s708 = ssub.s32 128, 128
      %709 = vsyncadd [#allocation3], %s708
      %s711 = sshll.u32 [#allocation2], 4
      %s712 = int_to_ptr.vmem [resolvable:$true] %s711
      %714 = dma.vmem_to_hbm [thread:$0]  %s712, 128, %s11, [#allocation3]
    $region49: #{tpu_custom_call.1} parent=1 // pred_fallthru
      _
    // Predicated region
    $region50: #{tpu_custom_call.1} parent=1 // pred_check
      _
    $region51: #{tpu_custom_call.1} parent=1 // pred_check_branch
      %716 = sbr.rel (0) target = $region53
    $region52: #{tpu_custom_call.1} parent=1 // pred_region
      %717 = dma.done [#allocation3], 128
    $region53: #{tpu_custom_call.1} parent=1 // pred_fallthru
      _
    %718 = vsyncpa [#allocation3], 1

</llo_original>
